<compile_context>
chip_gen: v7x
topology: tpu7x:2x2x1
jax: 0.10.0
libtpu: 0.0.40
codegen_flags: <defaults>
</compile_context>

<pallas_src>
import functools

import jax
import jax.numpy as jnp
from jax.experimental import pallas as pl
from jax.experimental.pallas import tpu as pltpu

LANES = 128
SUBLANES = 8
MAX_BLOCK_ROWS = 8192    # 8192 x 128 x 4B = 4 MiB per input per block
CHUNK_ROWS = 1024        # in-block accumulation chunk (512 KiB f32 intermediates)


def _round_up(x, m):
    return (x + m - 1) // m * m


def _msle_block_kernel(pred_ref, actual_ref, out_ref, *,
                       block_rows, total_rows, need_mask, fuse_scalar, inv_n):
    """One grid step: (block_rows, 128) block -> (8, 128) partial sum
    (or, when fuse_scalar, the final (1,1) mean)."""
    pid = pl.program_id(0)

    def block_sum(masked):
        acc = jnp.zeros((SUBLANES, LANES), jnp.float32)
        off = 0
        while off < block_rows:                      # static Python loop (unrolled)
            cr = min(CHUNK_ROWS, block_rows - off)   # multiple of 8 by construction
            p = pred_ref[off:off + cr, :].astype(jnp.float32)
            a = actual_ref[off:off + cr, :].astype(jnp.float32)
            if masked:
                # Row-level validity check (no per-element flat index -> no int32
                # overflow even for huge inputs).  Invalid rows contribute
                # log(1)-log(1) = 0.
                row = jax.lax.broadcasted_iota(jnp.int32, (cr, LANES), 0)
                global_row = pid * block_rows + off + row
                m = global_row < total_rows
                p = jnp.where(m, p, 0.0)
                a = jnp.where(m, a, 0.0)
            # Matches the PyTorch spec literally: torch.log(x + 1).
            # (jnp.log1p would be more accurate for tiny x; kept as-is for parity.)
            d = jnp.log(p + 1.0) - jnp.log(a + 1.0)
            sq = d * d
            # (cr,128) -> (cr//8, 8, 128) is a layout-preserving sublane split;
            # the axis-0 sum is pure VPU slab adds (no XLU in the hot loop).
            acc = acc + sq.reshape(cr // SUBLANES, SUBLANES, LANES).sum(axis=0)
            off += cr
        return acc

    def write(acc):
        if fuse_scalar:
            # Single-block case: finish the reduction in-kernel (one launch).
            s = jnp.sum(acc, axis=0, keepdims=True)   # (1, 128)
            s = jnp.sum(s, axis=1, keepdims=True)     # (1, 1)
            out_ref[...] = s * inv_n
        else:
            out_ref[...] = acc

    if need_mask:
        last = pl.num_programs(0) - 1

        @pl.when(pid == last)
        def _():
            write(block_sum(True))

        @pl.when(pid != last)   # unmasked fast path for the N-1 full blocks
        def _():
            write(block_sum(False))
    else:
        write(block_sum(False))


def msle_loss(pred, actual):
    """MSLE loss: mean((log(pred+1) - log(actual+1))^2). Returns an f32 scalar."""
    assert pred.shape == actual.shape
    n = pred.size

    pred_f = pred.reshape(-1)
    actual_f = actual.reshape(-1)

    # 128-aligned prefix goes through the Pallas kernel; the (<128 element) tail,
    # if any, is summed with a trivial XLA expression (no whole-array pad/copy).
    n_main = (n // LANES) * LANES
    tail = n - n_main

    main_sum = None
    fused_result = None

    if n_main > 0:
        rows = n_main // LANES
        if tail == 0:
            pred2d = pred_f.reshape(rows, LANES)          # bitcast reshape, no copy
            actual2d = actual_f.reshape(rows, LANES)
        else:
            pred2d = pred_f[:n_main].reshape(rows, LANES)
            actual2d = actual_f[:n_main].reshape(rows, LANES)

        block_rows = min(MAX_BLOCK_ROWS, _round_up(rows, SUBLANES))
        num_blocks = pl.cdiv(rows, block_rows)
        need_mask = (num_blocks * block_rows) != rows
        fuse_scalar = (num_blocks == 1) and (tail == 0)

        kernel = functools.partial(
            _msle_block_kernel,
            block_rows=block_rows,
            total_rows=rows,
            need_mask=need_mask,
            fuse_scalar=fuse_scalar,
            inv_n=1.0 / float(n),
        )

        if fuse_scalar:
            out_shape = jax.ShapeDtypeStruct((1, 1), jnp.float32)
            out_spec = pl.BlockSpec((1, 1), lambda i: (0, 0))
        else:
            out_shape = jax.ShapeDtypeStruct((num_blocks * SUBLANES, LANES),
                                             jnp.float32)
            out_spec = pl.BlockSpec((SUBLANES, LANES), lambda i: (i, 0))

        # VMEM budget: 2 inputs x 2 pipeline buffers x block + headroom for the
        # chunked intermediates / output.  <= 24 MiB even at MAX_BLOCK_ROWS, so it
        # is safe on v5e (128 MiB physical) and within v7x's default scoped limit.
        block_bytes = block_rows * LANES * 4
        vmem_limit = 4 * block_bytes + (8 << 20)

        out_bytes = (1 * 1 * 4) if fuse_scalar else (num_blocks * SUBLANES * LANES * 4)
        cost = pl.CostEstimate(
            flops=5 * n_main,
            transcendentals=2 * n_main,
            bytes_accessed=8 * n_main + out_bytes,
        )

        result = pl.pallas_call(
            kernel,
            out_shape=out_shape,
            grid_spec=pl.GridSpec(
                grid=(num_blocks,),
                in_specs=[
                    pl.BlockSpec((block_rows, LANES), lambda i: (i, 0)),
                    pl.BlockSpec((block_rows, LANES), lambda i: (i, 0)),
                ],
                out_specs=out_spec,
            ),
            compiler_params=pltpu.CompilerParams(
                # Each step writes its own output block -> safe to shard blocks
                # across cores (v7x two TensorCores); no-op on single-TC v5e/v6e.
                dimension_semantics=("parallel",),
                vmem_limit_bytes=vmem_limit,
            ),
            cost_estimate=cost,
        )(pred2d, actual2d)

        if fuse_scalar:
            fused_result = result[0, 0]
        else:
            main_sum = jnp.sum(result)

    if fused_result is not None:
        return fused_result

    total = jnp.float32(0.0)
    if main_sum is not None:
        total = total + main_sum
    if tail > 0:
        pt = pred_f[n_main:].astype(jnp.float32)
        at = actual_f[n_main:].astype(jnp.float32)
        total = total + jnp.sum((jnp.log(pt + 1.0) - jnp.log(at + 1.0)) ** 2)
    return total / jnp.float32(n)


def _reference(pred, actual):
    return jnp.mean((jnp.log(pred.astype(jnp.float32) + 1.0)
                     - jnp.log(actual.astype(jnp.float32) + 1.0)) ** 2)


if __name__ == "__main__":
    msle = jax.jit(msle_loss)

    # Primary case: NCHW (2, 4, 16, 16) -> (16, 128), single block, fully fused
    # scalar output (one device launch, no pad, no mask).
    k1, k2 = jax.random.split(jax.random.PRNGKey(0))
    shape = (2, 4, 16, 16)
    pred = jax.random.uniform(k1, shape, dtype=jnp.float32, minval=0.0, maxval=5.0)
    actual = jax.random.uniform(k2, shape, dtype=jnp.float32, minval=0.0, maxval=5.0)
    loss = jax.block_until_ready(msle(pred, actual))
    ref = _reference(pred, actual)
    assert jnp.allclose(loss, ref, rtol=1e-5, atol=1e-6), (loss, ref)

    # Ragged case: exercises the unaligned XLA tail + in-kernel row mask.
    k3, k4 = jax.random.split(jax.random.PRNGKey(1))
    rag_shape = (3, 5, 17, 19)   # 4845 elements: 37 full rows + 109-element tail
    pred_r = jax.random.uniform(k3, rag_shape, dtype=jnp.float32, minval=0.0, maxval=5.0)
    actual_r = jax.random.uniform(k4, rag_shape, dtype=jnp.float32, minval=0.0, maxval=5.0)
    loss_r = jax.block_until_ready(msle(pred_r, actual_r))
    ref_r = _reference(pred_r, actual_r)
    assert jnp.allclose(loss_r, ref_r, rtol=1e-5, atol=1e-6), (loss_r, ref_r)

    # Multi-block case: exercises the parallel per-block partials + XLA epilogue.
    k5, k6 = jax.random.split(jax.random.PRNGKey(2))
    big_shape = (2, 4, 512, 512)  # 2_097_152 elems -> 16384 rows -> 2 blocks
    pred_b = jax.random.uniform(k5, big_shape, dtype=jnp.float32, minval=0.0, maxval=5.0)
    actual_b = jax.random.uniform(k6, big_shape, dtype=jnp.float32, minval=0.0, maxval=5.0)
    loss_b = jax.block_until_ready(msle(pred_b, actual_b))
    ref_b = _reference(pred_b, actual_b)
    assert jnp.allclose(loss_b, ref_b, rtol=1e-5, atol=1e-5), (loss_b, ref_b)

    print("KERNEL_OK")
</pallas_src>

<mosaic_0001>
module attributes {stable_mosaic.version = 11 : i64} {
  func.func @_msle_block_kernel(%arg0: i32, %arg1: memref<16x128xf32, #tpu.memory_space<vmem>>, %arg2: memref<16x128xf32, #tpu.memory_space<vmem>>, %arg3: memref<1x1xf32, #tpu.memory_space<vmem>>) attributes {dimension_semantics = [#tpu.dimension_semantics<parallel>], iteration_bounds = array<i64: 1>, scalar_prefetch = 0 : i64, scratch_operands = 0 : i64, tpu.core_type = #tpu.core_type<tc>, window_params = [{transform_indices = @transform_0, window_bounds = array<i64: 16, 128>}, {transform_indices = @transform_1, window_bounds = array<i64: 16, 128>}, {pipeline_mode = #tpu.pipeline_mode<synchronous>, transform_indices = @transform_2, window_bounds = array<i64: 1, 1>}]} {
    %cst = arith.constant 0.000000e+00 : f32
    %0 = vector.broadcast %cst : f32 to vector<8x128xf32>
    %c0 = arith.constant 0 : index
    %c0_0 = arith.constant 0 : index
    %1 = vector.load %arg1[%c0, %c0_0] : memref<16x128xf32, #tpu.memory_space<vmem>>, vector<16x128xf32>
    %c0_1 = arith.constant 0 : index
    %c0_2 = arith.constant 0 : index
    %2 = vector.load %arg2[%c0_1, %c0_2] : memref<16x128xf32, #tpu.memory_space<vmem>>, vector<16x128xf32>
    %cst_3 = arith.constant 1.000000e+00 : f32
    %3 = vector.broadcast %cst_3 : f32 to vector<16x128xf32>
    %4 = arith.addf %1, %3 : vector<16x128xf32>
    %5 = math.log %4 : vector<16x128xf32>
    %cst_4 = arith.constant 1.000000e+00 : f32
    %6 = vector.broadcast %cst_4 : f32 to vector<16x128xf32>
    %7 = arith.addf %2, %6 : vector<16x128xf32>
    %8 = math.log %7 : vector<16x128xf32>
    %9 = arith.subf %5, %8 : vector<16x128xf32>
    %10 = arith.mulf %9, %9 : vector<16x128xf32>
    %11 = vector.shape_cast %10 : vector<16x128xf32> to vector<2x8x128xf32>
    %cst_5 = arith.constant dense<0.000000e+00> : vector<8x128xf32>
    %12 = vector.multi_reduction <add>, %11, %cst_5 [0] : vector<2x8x128xf32> to vector<8x128xf32>
    %13 = arith.addf %0, %12 : vector<8x128xf32>
    %cst_6 = arith.constant dense<0.000000e+00> : vector<128xf32>
    %14 = vector.multi_reduction <add>, %13, %cst_6 [0] : vector<8x128xf32> to vector<128xf32>
    %15 = vector.shape_cast %14 : vector<128xf32> to vector<1x128xf32>
    %cst_7 = arith.constant dense<0.000000e+00> : vector<1xf32>
    %16 = vector.multi_reduction <add>, %15, %cst_7 [1] : vector<1x128xf32> to vector<1xf32>
    %17 = vector.shape_cast %16 : vector<1xf32> to vector<1x1xf32>
    %cst_8 = arith.constant 4.8828125E-4 : f32
    %18 = vector.broadcast %cst_8 : f32 to vector<1x1xf32>
    %19 = arith.mulf %17, %18 : vector<1x1xf32>
    %c0_9 = arith.constant 0 : index
    %c0_10 = arith.constant 0 : index
    %20 = vector.load %arg3[%c0_9, %c0_10] : memref<1x1xf32, #tpu.memory_space<vmem>>, vector<1x1xf32>
    tpu.vector_store %arg3[%c0_9, %c0_10], %19 {strides = array<i32>} : memref<1x1xf32, #tpu.memory_space<vmem>>, vector<1x1xf32>,
    return
  }
  func.func @transform_0(%arg0: i32) -> (i32, i32) {
    %c0_i32 = arith.constant 0 : i32
    %c0_i32_0 = arith.constant 0 : i32
    return %arg0, %c0_i32 : i32, i32
  }
  func.func @transform_1(%arg0: i32) -> (i32, i32) {
    %c0_i32 = arith.constant 0 : i32
    %c0_i32_0 = arith.constant 0 : i32
    return %arg0, %c0_i32 : i32, i32
  }
  func.func @transform_2(%arg0: i32) -> (i32, i32) {
    %c0_i32 = arith.constant 0 : i32
    %c0_i32_0 = arith.constant 0 : i32
    %c0_i32_1 = arith.constant 0 : i32
    return %c0_i32, %c0_i32_0 : i32, i32
  }
}

</mosaic_0001>

<llo_original>
// kernel: msle_loss.1
$region0: #{msle_loss.1}
  #allocation0 [shape = 'u32[]', space=smem, size = 0x4, offset = 0x4, fixed_abs, tag = 'smem constant byte address 0x4 - core index']
  #allocation1 [shape = 'u32[144,128]{1,0:T(1,128)}', space=vmem, size = 0x12000, scoped, tag = 'internal scratch']
  %s0 = inlined_call_operand.vmem [shape: f32[16,128], index: 0, kind: input, shape index: {}]
  %s1 = inlined_call_operand.vmem [shape: f32[16,128], index: 1, kind: input, shape index: {}]
  %s2 = inlined_call_operand.hbm [shape: f32[1,1], index: 2, kind: output, shape index: {}]
  %s3 = sld [smem:[#allocation0]]
  $region18: #{msle_loss.1} parent=0
    _
  %s5 = ssub.s32 1, %s3
  %s6 = scalar_select 0, %s5, %s3
  $region1: #{msle_loss.1} parent=0
    #allocation2 [shape = 'u8[512]{0}', space=vmem, size = 0x400, scoped, tag = 'output window, operand 0, single buffered']
    #allocation3 [shape = 's32[1]{0}', space=sflag, size = 0x4, scoped, tag = 'scoped memory for msle_loss.1']
    %7 = vsyncpa [#allocation3], 0
    // Predicated region
    $region2: #{msle_loss.1} parent=1 // pred_check
      _
    $region3: #{msle_loss.1} parent=1 // pred_check_branch
      %9 = sbr.rel (0) target = $region5
    $region4: #{msle_loss.1} parent=1 // pred_region
      _
    $region5: #{msle_loss.1} parent=1 // pred_fallthru
      _
    // Predicated region
    $region6: #{msle_loss.1} parent=1 // pred_check
      _
    $region7: #{msle_loss.1} parent=1 // pred_check_branch
      %11 = sbr.rel (0) target = $region9
    $region8: #{msle_loss.1} parent=1 // pred_region
      _
    $region9: #{msle_loss.1} parent=1 // pred_fallthru
      _
    %v12 = vld [vmem:[%s0] sm:$0xff]
    %v13 = vld [vmem:[%s0 + $0x8] sm:$0xff]
    %v14 = vld [vmem:[%s1] sm:$0xff]
    %v15 = vld [vmem:[%s1 + $0x8] sm:$0xff]
    %v16 = vadd.f32 %v12, 1.0
    %v17 = vadd.f32 %v13, 1.0
    %v18 = vlog2.pop %v16
    %v19 = vmul.f32 %v18, 0.6931472
    %v20 = vlog2.pop %v17
    %v21 = vmul.f32 %v20, 0.6931472
    %v22 = vadd.f32 %v14, 1.0
    %v23 = vadd.f32 %v15, 1.0
    %v24 = vlog2.pop %v22
    %v25 = vmul.f32 %v24, 0.6931472
    %v26 = vlog2.pop %v23
    %v27 = vmul.f32 %v26, 0.6931472
    %v28 = vsub.f32 %v19, %v25
    %v29 = vsub.f32 %v21, %v27
    %v30 = vmul.f32 %v28, %v28
    %v31 = vmul.f32 %v29, %v29
    %v32 = vadd.f32 %v30, %v31
    %v33 = vadd.f32 %v32, 0.0
    %v34 = vrot.slane %v33, 4
    %v35 = vadd.f32 %v33, %v34
    %v36 = vrot.slane %v35, 2
    %v37 = vadd.f32 %v35, %v36
    %v38 = vrot.slane %v37, 1
    %v39 = vadd.f32 %v37, %v38
    %40 = vadd.xlane.f32.xlu0 %v39
    %v41 = vpop.xlane.xlu0 %40
    %v42 = vmul.f32 %v41, 0.00048828125
    %vm43 = vcmask 0
    %44 = vst.msk [vmem:[#allocation2] sm:$0x1] %vm43, %v42
    // Predicated region
    $region10: #{msle_loss.1} parent=1 // pred_check
      _
    $region11: #{msle_loss.1} parent=1 // pred_check_branch
      %46 = sbr.rel (0) target = $region13
    $region12: #{msle_loss.1} parent=1 // pred_region
      %s48 = ssub.s32 16, 16
      %49 = vsyncadd [#allocation3], %s48
      %s51 = sshll.u32 [#allocation2], 4
      %s52 = int_to_ptr.vmem [resolvable:$true] %s51
      %54 = dma.vmem_to_hbm [thread:$0]  %s52, 16, %s2, [#allocation3]
    $region13: #{msle_loss.1} parent=1 // pred_fallthru
      _
    // Predicated region
    $region14: #{msle_loss.1} parent=1 // pred_check
      _
    $region15: #{msle_loss.1} parent=1 // pred_check_branch
      %56 = sbr.rel (0) target = $region17
    $region16: #{msle_loss.1} parent=1 // pred_region
      %57 = dma.done [#allocation3], 16
    $region17: #{msle_loss.1} parent=1 // pred_fallthru
      _
    %58 = vsyncpa [#allocation3], 1

</llo_original>
